<compile_context>
chip_gen: v6e
topology: v6e:2x2x1
jax: 0.10.0
libtpu: 0.0.40
codegen_flags: <defaults>
</compile_context>

<pallas_src>
import functools

import jax
import jax.numpy as jnp
from jax.experimental import pallas as pl
from jax.experimental.pallas import tpu as pltpu


def _round_up(x: int, m: int) -> int:
    return ((x + m - 1) // m) * m


def _mean_pool_kernel(x_ref, o_ref, acc_ref, *, inv_t, t_total, tt, mask_t):
    # x_ref: (tm, tt) input tile; o_ref: (tm, 1) output tile;
    # acc_ref: (tm, 1) f32 accumulator resident across the T (reduction) axis.
    k = pl.program_id(1)

    @pl.when(k == 0)
    def _init():
        acc_ref[...] = jnp.zeros_like(acc_ref)

    x = x_ref[...]
    if mask_t:
        # Ragged last T tile: zero the out-of-bounds lanes so stale VMEM never
        # enters the accumulation. For all earlier tiles `valid >= tt`, so the
        # compare/select is a no-op (cheap VPU work, hidden under the DMA).
        valid = t_total - k * tt
        lane = jax.lax.broadcasted_iota(jnp.int32, x.shape, 1)
        x = jnp.where(lane < valid, x, jnp.zeros_like(x))

    # Fused upcast + sublane-major accumulation: lane-reduce each row into a
    # (tm, 1) f32 column (no cross-lane relayout per step).
    acc_ref[...] += jnp.sum(x, axis=-1, keepdims=True, dtype=jnp.float32)

    @pl.when(k == pl.num_programs(1) - 1)
    def _finalize():
        # Divide by the TRUE T (masked lanes contributed zeros).
        o_ref[...] = (acc_ref[...] * inv_t).astype(o_ref.dtype)


def mean_stat_pool_1d(x: jax.Array, dim_to_reduce: int = 2,
                      *, row_tile: int = 512, max_t_tile: int | None = None
                      ) -> jax.Array:
    """Mean pooling over `dim_to_reduce` (default 2) as a Pallas TPU kernel."""
    # TODO(synk): only the module's default dim_to_reduce == 2 is implemented.
    assert dim_to_reduce == 2, "kernel implemented for dim_to_reduce == 2"
    assert x.ndim == 3, "expected (B, C, T) input"
    B, C, T = x.shape
    rows = B * C

    # Flatten (B, C) -> rows (free reshape); reduction axis stays last (lanes).
    x2 = x.reshape(rows, T)

    itemsize = jnp.dtype(x.dtype).itemsize
    pack = {4: 8, 2: 16, 1: 32}.get(itemsize, 8)   # sublane pack per dtype

    # Generation-aware VMEM budget (per double-buffered input buffer).
    try:
        vmem_cap = int(pltpu.get_tpu_info().vmem_capacity_bytes)
    except Exception:
        vmem_cap = 64 * 1024 * 1024          # conservative (v7x per-TC) fallback
    budget = max(4 * 1024 * 1024, min(16 * 1024 * 1024, vmem_cap // 8))

    # Row tiling (independent, "parallel" axis). Force >= 2 row tiles when rows
    # permit so dual-TC chips (v7x) shard the grid; tt below re-expands to keep
    # the tile at the VMEM budget, so 1-TC chips lose nothing.
    nr_floor = 2 if rows > pack else 1
    nr = max(nr_floor, pl.cdiv(rows, row_tile))
    tm = _round_up(pl.cdiv(rows, nr), pack)
    nr = pl.cdiv(rows, tm)
    rows_p = nr * tm

    # T tiling (reduction, "arbitrary", last grid axis): fill the VMEM budget.
    tt_cap = max(128, (budget // (tm * itemsize)) // 128 * 128)
    if max_t_tile is not None:
        tt_cap = max(128, min(tt_cap, (max_t_tile // 128) * 128))
    if T <= tt_cap:
        nt, tt = 1, T            # single full-extent T block (any T allowed)
        mask_t = False
    else:
        nt = pl.cdiv(T, tt_cap)
        tt = _round_up(pl.cdiv(T, nt), 128)
        nt = pl.cdiv(T, tt)
        mask_t = (T % tt) != 0   # ragged last tile -> mask stale lanes in-kernel

    # Explicit scoped-VMEM budget: double-buffered in/out tiles + accumulator,
    # ~2x headroom, clamped to half the chip's physical VMEM.
    in_bytes = 2 * tm * tt * itemsize
    out_bytes = 2 * tm * itemsize
    acc_bytes = tm * 4
    vmem_limit = int(min(vmem_cap // 2,
                         max(16 * 1024 * 1024,
                             2 * (in_bytes + out_bytes + acc_bytes))))

    kernel = functools.partial(_mean_pool_kernel, inv_t=1.0 / float(T),
                               t_total=T, tt=tt, mask_t=mask_t)

    out = pl.pallas_call(
        kernel,
        out_shape=jax.ShapeDtypeStruct((rows_p, 1), x.dtype),
        grid=(nr, nt),
        in_specs=[pl.BlockSpec((tm, tt), lambda i, k: (i, k))],
        out_specs=pl.BlockSpec((tm, 1), lambda i, k: (i, 0)),
        scratch_shapes=[pltpu.VMEM((tm, 1), jnp.float32)],
        compiler_params=pltpu.CompilerParams(
            dimension_semantics=("parallel", "arbitrary"),
            vmem_limit_bytes=vmem_limit,
        ),
    )(x2)

    # Garbage rows from the ragged last row tile land beyond `rows`; slice off.
    return out[:rows, 0].reshape(B, C)


if __name__ == "__main__":
    key = jax.random.PRNGKey(0)

    # Small shape consistent with the module: (batch=2, channels=4, frames=16).
    x = jax.random.normal(key, (2, 4, 16), dtype=jnp.float32)
    out = jax.block_until_ready(mean_stat_pool_1d(x))
    ref = jnp.mean(x, axis=2)
    assert out.shape == (2, 4)
    assert jnp.allclose(out, ref, atol=1e-5, rtol=1e-5)

    # Second small case exercising the ragged paths (partial row tile, multi-step
    # reduction with a masked ragged last T tile) via a forced small T tile.
    k2 = jax.random.PRNGKey(1)
    y = jax.random.normal(k2, (3, 5, 333), dtype=jnp.float32)
    out2 = jax.block_until_ready(mean_stat_pool_1d(y, max_t_tile=128))
    ref2 = jnp.mean(y, axis=2)
    assert out2.shape == (3, 5)
    assert jnp.allclose(out2, ref2, atol=1e-5, rtol=1e-5)

    print("KERNEL_OK")
</pallas_src>

<mosaic_0001>
module attributes {stable_mosaic.version = 11 : i64} {
  func.func @_mean_pool_kernel(%arg0: i32, %arg1: i32, %arg2: memref<8x16xf32, #tpu.memory_space<vmem>>, %arg3: memref<8x1xf32, #tpu.memory_space<vmem>>, %arg4: memref<8x1xf32, #tpu.memory_space<vmem>>) attributes {dimension_semantics = [#tpu.dimension_semantics<parallel>, #tpu.dimension_semantics<arbitrary>], iteration_bounds = array<i64: 1, 1>, scalar_prefetch = 0 : i64, scratch_operands = 1 : i64, tpu.core_type = #tpu.core_type<tc>, window_params = [{transform_indices = @transform_0, window_bounds = array<i64: 8, 16>}, {transform_indices = @transform_1, window_bounds = array<i64: 8, 1>}]} {
    %c0_i32 = arith.constant 0 : i32
    %0 = arith.cmpi eq, %arg1, %c0_i32 : i32
    %1 = arith.extui %0 : i1 to i32
    %c0_i32_0 = arith.constant 0 : i32
    %2 = arith.cmpi ne, %1, %c0_i32_0 : i32
    scf.if %2 {
      %cst_8 = arith.constant 0.000000e+00 : f32
      %12 = vector.broadcast %cst_8 : f32 to vector<8x1xf32>
      %c0_9 = arith.constant 0 : index
      %c0_10 = arith.constant 0 : index
      %13 = vector.load %arg4[%c0_9, %c0_10] : memref<8x1xf32, #tpu.memory_space<vmem>>, vector<8x1xf32>
      tpu.vector_store %arg4[%c0_9, %c0_10], %12 {strides = array<i32>} : memref<8x1xf32, #tpu.memory_space<vmem>>, vector<8x1xf32>,
    } else {
    }
    %c0 = arith.constant 0 : index
    %c0_1 = arith.constant 0 : index
    %3 = vector.load %arg2[%c0, %c0_1] : memref<8x16xf32, #tpu.memory_space<vmem>>, vector<8x16xf32>
    %c0_2 = arith.constant 0 : index
    %c0_3 = arith.constant 0 : index
    %4 = vector.load %arg4[%c0_2, %c0_3] : memref<8x1xf32, #tpu.memory_space<vmem>>, vector<8x1xf32>
    %cst = arith.constant dense<0.000000e+00> : vector<8xf32>
    %5 = vector.multi_reduction <add>, %3, %cst [1] : vector<8x16xf32> to vector<8xf32>
    %6 = vector.shape_cast %5 : vector<8xf32> to vector<8x1xf32>
    %7 = arith.addf %4, %6 : vector<8x1xf32>
    %c0_4 = arith.constant 0 : index
    %c0_5 = arith.constant 0 : index
    %8 = vector.load %arg4[%c0_4, %c0_5] : memref<8x1xf32, #tpu.memory_space<vmem>>, vector<8x1xf32>
    tpu.vector_store %arg4[%c0_4, %c0_5], %7 {strides = array<i32>} : memref<8x1xf32, #tpu.memory_space<vmem>>, vector<8x1xf32>,
    %c0_i32_6 = arith.constant 0 : i32
    %9 = arith.cmpi eq, %arg1, %c0_i32_6 : i32
    %10 = arith.extui %9 : i1 to i32
    %c0_i32_7 = arith.constant 0 : i32
    %11 = arith.cmpi ne, %10, %c0_i32_7 : i32
    scf.if %11 {
      %c0_8 = arith.constant 0 : index
      %c0_9 = arith.constant 0 : index
      %12 = vector.load %arg4[%c0_8, %c0_9] : memref<8x1xf32, #tpu.memory_space<vmem>>, vector<8x1xf32>
      %cst_10 = arith.constant 6.250000e-02 : f32
      %13 = vector.broadcast %cst_10 : f32 to vector<8x1xf32>
      %14 = arith.mulf %12, %13 : vector<8x1xf32>
      %c0_11 = arith.constant 0 : index
      %c0_12 = arith.constant 0 : index
      %15 = vector.load %arg3[%c0_11, %c0_12] : memref<8x1xf32, #tpu.memory_space<vmem>>, vector<8x1xf32>
      tpu.vector_store %arg3[%c0_11, %c0_12], %14 {strides = array<i32>} : memref<8x1xf32, #tpu.memory_space<vmem>>, vector<8x1xf32>,
    } else {
    }
    return
  }
  func.func @transform_0(%arg0: i32, %arg1: i32) -> (i32, i32) {
    %c0_i32 = arith.constant 0 : i32
    return %arg0, %arg1 : i32, i32
  }
  func.func @transform_1(%arg0: i32, %arg1: i32) -> (i32, i32) {
    %c0_i32 = arith.constant 0 : i32
    %c0_i32_0 = arith.constant 0 : i32
    return %arg0, %c0_i32 : i32, i32
  }
}

</mosaic_0001>

<llo_original>
// kernel: tpu_custom_call.1
$region0: #{tpu_custom_call.1}
  #allocation0 [shape = 'u32[]', space=smem, size = 0x4, offset = 0x4, fixed_abs, tag = 'smem constant byte address 0x4 - core index']
  #allocation1 [shape = 'u32[144,128]{1,0:T(1,128)}', space=vmem, size = 0x12000, scoped, tag = 'internal scratch']
  #allocation2 [shape = 'f32[8,1]{1,0:T(8,128)}', space=vmem, size = 0x1000, scoped, tag = 'scratch operand']
  %s0 = inlined_call_operand.hbm [shape: f32[8,16], index: 0, kind: input, shape index: {}]
  %s1 = inlined_call_operand.vmem [shape: f32[8,1], index: 1, kind: output, shape index: {}]
  %s2 = sld [smem:[#allocation0]]
  $region26: #{tpu_custom_call.1} parent=0
    _
  %s4 = ssub.s32 1, %s2
  %s5 = scalar_select 0, %s4, %s2
  $region1: #{tpu_custom_call.1} parent=0
    #allocation3 [shape = 'u8[4096]{0}', space=vmem, size = 0x1000, scoped, tag = 'input window, operand 0, single buffered']
    #allocation4 [shape = 's32[1]{0}', space=sflag, size = 0x4, scoped, tag = 'scoped memory for tpu_custom_call.1']
    %6 = vsyncpa [#allocation4], 0
    // Predicated region
    $region2: #{tpu_custom_call.1} parent=1 // pred_check
      _
    $region3: #{tpu_custom_call.1} parent=1 // pred_check_branch
      %8 = sbr.rel (0) target = $region5
    $region4: #{tpu_custom_call.1} parent=1 // pred_region
      %s10 = ssub.s32 128, 128
      %11 = vsyncadd [#allocation4], %s10
      %s13 = sshll.u32 [#allocation3], 4
      %s14 = int_to_ptr.vmem [resolvable:$true] %s13
      %16 = dma.hbm_to_vmem [thread:$0]  %s0, 128, %s14, [#allocation4]
    $region5: #{tpu_custom_call.1} parent=1 // pred_fallthru
      _
    // Predicated region
    $region6: #{tpu_custom_call.1} parent=1 // pred_check
      _
    $region7: #{tpu_custom_call.1} parent=1 // pred_check_branch
      %18 = sbr.rel (0) target = $region9
    $region8: #{tpu_custom_call.1} parent=1 // pred_region
      %19 = dma.done [#allocation4], 128
    $region9: #{tpu_custom_call.1} parent=1 // pred_fallthru
      _
    %p20 = scmp.eq.s32.totalorder 0, 0
    // Predicated region
    $region10: #{tpu_custom_call.1} parent=1 // pred_check
      %p21 = pneg %p20
    $region11: #{tpu_custom_call.1} parent=1 // pred_check_branch
      %23 = sbr.rel (%p21) target = $region13
    $region12: #{tpu_custom_call.1} parent=1 // pred_region
      %vm24 = vcmask 7168
      %25 = vst.msk [vmem:[#allocation2] sm:$0xff] %vm24, 0.0
    $region13: #{tpu_custom_call.1} parent=1 // pred_fallthru
      _
    %v26 = vld [vmem:[#allocation3] sm:$0xff]
    %v27 = vld [vmem:[#allocation2] sm:$0xff]
    %vm28 = vcmask 130048
    %v29 = vsel %vm28, %v26, 0.0
    %30 = vadd.xlane.f32.xlu0 %v29
    %v31 = vpop.xlane.xlu0 %30
    %v32 = vadd.f32 %v27, %v31
    %vm33 = vcmask 7168
    %34 = vst.msk [vmem:[#allocation2] sm:$0xff] %vm33, %v32
    // Predicated region
    $region14: #{tpu_custom_call.1} parent=1 // pred_check
      %p35 = pneg %p20
    $region15: #{tpu_custom_call.1} parent=1 // pred_check_branch
      %37 = sbr.rel (%p35) target = $region17
    $region16: #{tpu_custom_call.1} parent=1 // pred_region
      %v38 = vld [vmem:[#allocation2] sm:$0xff]
      %v39 = vmul.f32 %v38, 0.0625
      %40 = vst.msk [vmem:[%s1] sm:$0xff] %vm33, %v39
    $region17: #{tpu_custom_call.1} parent=1 // pred_fallthru
      _
    // Predicated region
    $region18: #{tpu_custom_call.1} parent=1 // pred_check
      _
    $region19: #{tpu_custom_call.1} parent=1 // pred_check_branch
      %42 = sbr.rel (0) target = $region21
    $region20: #{tpu_custom_call.1} parent=1 // pred_region
      _
    $region21: #{tpu_custom_call.1} parent=1 // pred_fallthru
      _
    // Predicated region
    $region22: #{tpu_custom_call.1} parent=1 // pred_check
      _
    $region23: #{tpu_custom_call.1} parent=1 // pred_check_branch
      %44 = sbr.rel (0) target = $region25
    $region24: #{tpu_custom_call.1} parent=1 // pred_region
      _
    $region25: #{tpu_custom_call.1} parent=1 // pred_fallthru
      _
    %45 = vsyncpa [#allocation4], 1

</llo_original>
